<compile_context>
chip_gen: v7x
topology: tpu7x:2x2x1
jax: 0.10.0
libtpu: 0.0.40
codegen_flags: <defaults>
</compile_context>

<pallas_src>
import jax
import jax.numpy as jnp
from jax.experimental import pallas as pl
from jax.experimental.pallas import tpu as pltpu

LANE = 128  # lane width: pad feature *output* dims to this


# ----------------------------- Pallas kernel --------------------------------
def _gcn_kernel(adj_ref, x_ref, w1_ref, w23_ref, b_ref, out_ref):
    adj = adj_ref[...]                                   # [B*N, B*N] f32 (block-diag)
    x = x_ref[...]                                       # [B*N, Fin] f32

    # layer 1: GCNConv(in, 2*out) + ReLU
    h = jnp.dot(x, w1_ref[...], preferred_element_type=jnp.float32)
    h = jnp.dot(adj, h, preferred_element_type=jnp.float32)
    h = jnp.maximum(h + b_ref[0], 0.0)

    # layer 2: GCNConv(2*out, 2*out) + ReLU
    h = jnp.dot(h, w23_ref[0], preferred_element_type=jnp.float32)
    h = jnp.dot(adj, h, preferred_element_type=jnp.float32)
    h = jnp.maximum(h + b_ref[1], 0.0)

    # layer 3: GCNConv(2*out, out)  (no activation)
    h = jnp.dot(h, w23_ref[1], preferred_element_type=jnp.float32)
    h = jnp.dot(adj, h, preferred_element_type=jnp.float32)
    h = h + b_ref[2]                                     # [B*N, 128] f32

    # torch.min(out, dim=0).values per graph: [B*N,128] -> [B,N,128] -> min over
    # nodes (XLU sublane reduce), then ONE lane-dense [B,128] store.
    B = out_ref.shape[0]
    N = adj.shape[0] // B
    out_ref[...] = jnp.min(h.reshape(B, N, h.shape[-1]), axis=1)


# ------------------------------ wrapper --------------------------------------
def _pad_to(a, axis, target):
    pad = target - a.shape[axis]
    if pad <= 0:
        return a
    widths = [(0, 0)] * a.ndim
    widths[axis] = (0, pad)
    return jnp.pad(a, widths)


@jax.jit
def gcn_mol_gcn_pallas(adj_b, x_b, params):
    """Batched fused 3-layer GCN + node-min.

    adj_b: [B, N, N] normalized dense adjacencies, x_b: [B, N, Fin].
    Returns [B, out_channels]."""
    (w1, b1), (w2, b2), (w3, b3) = params
    B, N, _ = adj_b.shape
    Fin = x_b.shape[-1]
    out_channels = w3.shape[1]
    BN = B * N
    f32 = jnp.float32

    # Block-diagonal adjacency [B*N, B*N]: graphs stay decoupled, batch is one
    # big matmul.  (At B=4, N=8 this is a 4 KiB f32 slab.)
    eye = jnp.eye(B, dtype=f32)
    adj_big = jnp.einsum('bij,bk->bikj', adj_b.astype(f32), eye).reshape(BN, BN)

    # Row-stacked node features (NO lane padding of the K dim).
    x_big = x_b.astype(f32).reshape(BN, Fin)

    # Zero-pad feature *output* dims to 128 lanes (math-neutral: padded columns
    # of W and padded bias lanes are zero, stay zero through bias-add and ReLU).
    w1p = _pad_to(w1, 1, LANE).astype(f32)                        # [Fin, 128]
    w2p = _pad_to(_pad_to(w2, 0, LANE), 1, LANE).astype(f32)      # [128, 128]
    w3p = _pad_to(_pad_to(w3, 0, LANE), 1, LANE).astype(f32)      # [128, 128]
    w23 = jnp.stack([w2p, w3p])                                   # [2, 128, 128]
    bias = jnp.stack([_pad_to(b1, -1, LANE),
                      _pad_to(b2, -1, LANE),
                      _pad_to(b3, -1, LANE)]).astype(f32)         # [3, 1, 128]

    # Advisory cost estimate (single fused step).
    flops = (2 * BN * Fin * LANE + 2 * BN * BN * LANE           # layer 1
             + 2 * (2 * BN * LANE * LANE + 2 * BN * BN * LANE))  # layers 2, 3
    bytes_accessed = (BN * BN * 4 + BN * Fin * 4                 # adj, x
                      + Fin * LANE * 4 + 2 * LANE * LANE * 4     # weights
                      + 3 * LANE * 4 + B * LANE * 4)             # biases, output

    out = pl.pallas_call(
        _gcn_kernel,
        out_shape=jax.ShapeDtypeStruct((B, LANE), jnp.float32),
        grid=(1,),
        in_specs=[
            pl.BlockSpec((BN, BN), lambda i: (0, 0)),            # block-diag Ahat
            pl.BlockSpec((BN, Fin), lambda i: (0, 0)),           # node features
            pl.BlockSpec((Fin, LANE), lambda i: (0, 0)),         # W1
            pl.BlockSpec((2, LANE, LANE), lambda i: (0, 0, 0)),  # W2, W3
            pl.BlockSpec((3, 1, LANE), lambda i: (0, 0, 0)),     # b1, b2, b3
        ],
        out_specs=pl.BlockSpec((B, LANE), lambda i: (0, 0)),
        compiler_params=pltpu.CompilerParams(
            dimension_semantics=("arbitrary",)),
        cost_estimate=pl.CostEstimate(
            flops=int(flops),
            transcendentals=0,
            bytes_accessed=int(bytes_accessed)),
    )(adj_big, x_big, w1p, w23, bias)

    return out[:, :out_channels]                                  # drop padded lanes


# ------------------------------ JAX glue -------------------------------------
def gcn_norm_dense(edge_index, num_nodes):
    """Dense D^-1/2 (A + I) D^-1/2, matching PyG gcn_norm (add_self_loops=True)."""
    src = edge_index[0]
    dst = edge_index[1]
    loop = jnp.arange(num_nodes, dtype=edge_index.dtype)
    src = jnp.concatenate([src, loop])
    dst = jnp.concatenate([dst, loop])
    w = jnp.ones(src.shape[0], dtype=jnp.float32)
    deg = jnp.zeros((num_nodes,), jnp.float32).at[dst].add(w)
    dinv = jnp.where(deg > 0, 1.0 / jnp.sqrt(deg), 0.0)
    norm = dinv[src] * w * dinv[dst]
    # messages flow src -> dst, aggregated at dst:  Ahat[dst, src] = norm
    adj = jnp.zeros((num_nodes, num_nodes), jnp.float32).at[dst, src].add(norm)
    return adj


def init_params(key, in_channels, out_channels):
    """Deterministic glorot-ish init; biases zero (as in PyG GCNConv)."""
    hid = 2 * out_channels
    shapes = [(in_channels, hid), (hid, hid), (hid, out_channels)]
    params = []
    for fi, fo in shapes:
        key, sub = jax.random.split(key)
        scale = jnp.sqrt(6.0 / (fi + fo))
        w = jax.random.uniform(sub, (fi, fo), jnp.float32, -scale, scale)
        b = jnp.zeros((1, fo), jnp.float32)
        params.append((w, b))
    return params


def reference_forward(adj, x, params):
    """Pure-jnp f32 reference of the module math (single graph)."""
    (w1, b1), (w2, b2), (w3, b3) = params
    h = jnp.maximum(adj @ (x @ w1) + b1, 0.0)
    h = jnp.maximum(adj @ (h @ w2) + b2, 0.0)
    h = adj @ (h @ w3) + b3
    return jnp.min(h, axis=0)


# ------------------------------ main ------------------------------------------
if __name__ == "__main__":
    key = jax.random.PRNGKey(0)

    in_channels = 16
    out_channels = 8
    num_nodes = 8
    batch = 4            # graphs folded into one pallas_call step
    n_edges = 16

    adjs, xs = [], []
    for _ in range(batch):
        key, k_src, k_dst, k_x = jax.random.split(key, 4)
        src = jax.random.randint(k_src, (n_edges,), 0, num_nodes, dtype=jnp.int32)
        dst = jax.random.randint(k_dst, (n_edges,), 0, num_nodes, dtype=jnp.int32)
        edge_index = jnp.stack([src, dst], axis=0)           # [2, E]
        adjs.append(gcn_norm_dense(edge_index, num_nodes))
        xs.append(jax.random.normal(k_x, (num_nodes, in_channels), jnp.float32))
    adj_b = jnp.stack(adjs)                                   # [B, N, N]
    x_b = jnp.stack(xs)                                       # [B, N, Fin]

    params = init_params(key, in_channels, out_channels)

    out = gcn_mol_gcn_pallas(adj_b, x_b, params)
    jax.block_until_ready(out)
    assert out.shape == (batch, out_channels)

    # Tolerance covers only hardware default f32-matmul mode differences
    # (kernel vs XLA reference); the explicit bf16 casts of the previous
    # version are gone.
    for b in range(batch):
        ref = reference_forward(adj_b[b], x_b[b], params)
        assert jnp.allclose(out[b], ref, atol=2e-2, rtol=2e-2), (b, out[b], ref)

    print("KERNEL_OK")
</pallas_src>

<mosaic_0001>
module attributes {stable_mosaic.version = 11 : i64} {
  func.func @_gcn_kernel(%arg0: i32, %arg1: memref<32x32xf32, #tpu.memory_space<vmem>>, %arg2: memref<32x16xf32, #tpu.memory_space<vmem>>, %arg3: memref<16x128xf32, #tpu.memory_space<vmem>>, %arg4: memref<2x128x128xf32, #tpu.memory_space<vmem>>, %arg5: memref<3x1x128xf32, #tpu.memory_space<vmem>>, %arg6: memref<4x128xf32, #tpu.memory_space<vmem>>) attributes {dimension_semantics = [#tpu.dimension_semantics<arbitrary>], iteration_bounds = array<i64: 1>, scalar_prefetch = 0 : i64, scratch_operands = 0 : i64, tpu.core_type = #tpu.core_type<tc>, window_params = [{pipeline_mode = #tpu.pipeline_mode<synchronous>, transform_indices = @transform_0, window_bounds = array<i64: 32, 32>}, {pipeline_mode = #tpu.pipeline_mode<synchronous>, transform_indices = @transform_1, window_bounds = array<i64: 32, 16>}, {pipeline_mode = #tpu.pipeline_mode<synchronous>, transform_indices = @transform_2, window_bounds = array<i64: 16, 128>}, {pipeline_mode = #tpu.pipeline_mode<synchronous>, transform_indices = @transform_3, window_bounds = array<i64: 2, 128, 128>}, {pipeline_mode = #tpu.pipeline_mode<synchronous>, transform_indices = @transform_4, window_bounds = array<i64: 3, 1, 128>}, {pipeline_mode = #tpu.pipeline_mode<synchronous>, transform_indices = @transform_5, window_bounds = array<i64: 4, 128>}]} {
    %c0 = arith.constant 0 : index
    %c0_0 = arith.constant 0 : index
    %0 = vector.load %arg1[%c0, %c0_0] : memref<32x32xf32, #tpu.memory_space<vmem>>, vector<32x32xf32>
    %c0_1 = arith.constant 0 : index
    %c0_2 = arith.constant 0 : index
    %1 = vector.load %arg2[%c0_1, %c0_2] : memref<32x16xf32, #tpu.memory_space<vmem>>, vector<32x16xf32>
    %c0_3 = arith.constant 0 : index
    %c0_4 = arith.constant 0 : index
    %2 = vector.load %arg3[%c0_3, %c0_4] : memref<16x128xf32, #tpu.memory_space<vmem>>, vector<16x128xf32>
    %cst = arith.constant dense<0.000000e+00> : vector<32x128xf32>
    %3 = tpu.matmul %1, %2, %cst {dimension_numbers = #tpu.dot_dimension_numbers<[1], [0], [0], [1], [0, 0, 1, 1], [], []>} : vector<32x16xf32>, vector<16x128xf32>, vector<32x128xf32> -> vector<32x128xf32>
    %cst_5 = arith.constant dense<0.000000e+00> : vector<32x128xf32>
    %4 = tpu.matmul %0, %3, %cst_5 {dimension_numbers = #tpu.dot_dimension_numbers<[1], [0], [0], [1], [0, 0, 1, 1], [], []>} : vector<32x32xf32>, vector<32x128xf32>, vector<32x128xf32> -> vector<32x128xf32>
    %c0_6 = arith.constant 0 : index
    %c0_7 = arith.constant 0 : index
    %c0_8 = arith.constant 0 : index
    %5 = vector.load %arg5[%c0_6, %c0_7, %c0_8] : memref<3x1x128xf32, #tpu.memory_space<vmem>>, vector<1x1x128xf32>
    %6 = vector.shape_cast %5 : vector<1x1x128xf32> to vector<1x128xf32>
    %7 = vector.broadcast %6 : vector<1x128xf32> to vector<32x128xf32>
    %8 = arith.addf %4, %7 : vector<32x128xf32>
    %cst_9 = arith.constant 0.000000e+00 : f32
    %9 = vector.broadcast %cst_9 : f32 to vector<32x128xf32>
    %10 = arith.maximumf %8, %9 : vector<32x128xf32>
    %c0_10 = arith.constant 0 : index
    %c0_11 = arith.constant 0 : index
    %c0_12 = arith.constant 0 : index
    %11 = vector.load %arg4[%c0_10, %c0_11, %c0_12] : memref<2x128x128xf32, #tpu.memory_space<vmem>>, vector<1x128x128xf32>
    %12 = vector.shape_cast %11 : vector<1x128x128xf32> to vector<128x128xf32>
    %cst_13 = arith.constant dense<0.000000e+00> : vector<32x128xf32>
    %13 = tpu.matmul %10, %12, %cst_13 {dimension_numbers = #tpu.dot_dimension_numbers<[1], [0], [0], [1], [0, 0, 1, 1], [], []>} : vector<32x128xf32>, vector<128x128xf32>, vector<32x128xf32> -> vector<32x128xf32>
    %cst_14 = arith.constant dense<0.000000e+00> : vector<32x128xf32>
    %14 = tpu.matmul %0, %13, %cst_14 {dimension_numbers = #tpu.dot_dimension_numbers<[1], [0], [0], [1], [0, 0, 1, 1], [], []>} : vector<32x32xf32>, vector<32x128xf32>, vector<32x128xf32> -> vector<32x128xf32>
    %c1 = arith.constant 1 : index
    %c0_15 = arith.constant 0 : index
    %c0_16 = arith.constant 0 : index
    %15 = vector.load %arg5[%c1, %c0_15, %c0_16] : memref<3x1x128xf32, #tpu.memory_space<vmem>>, vector<1x1x128xf32>
    %16 = vector.shape_cast %15 : vector<1x1x128xf32> to vector<1x128xf32>
    %17 = vector.broadcast %16 : vector<1x128xf32> to vector<32x128xf32>
    %18 = arith.addf %14, %17 : vector<32x128xf32>
    %cst_17 = arith.constant 0.000000e+00 : f32
    %19 = vector.broadcast %cst_17 : f32 to vector<32x128xf32>
    %20 = arith.maximumf %18, %19 : vector<32x128xf32>
    %c1_18 = arith.constant 1 : index
    %c0_19 = arith.constant 0 : index
    %c0_20 = arith.constant 0 : index
    %21 = vector.load %arg4[%c1_18, %c0_19, %c0_20] : memref<2x128x128xf32, #tpu.memory_space<vmem>>, vector<1x128x128xf32>
    %22 = vector.shape_cast %21 : vector<1x128x128xf32> to vector<128x128xf32>
    %cst_21 = arith.constant dense<0.000000e+00> : vector<32x128xf32>
    %23 = tpu.matmul %20, %22, %cst_21 {dimension_numbers = #tpu.dot_dimension_numbers<[1], [0], [0], [1], [0, 0, 1, 1], [], []>} : vector<32x128xf32>, vector<128x128xf32>, vector<32x128xf32> -> vector<32x128xf32>
    %cst_22 = arith.constant dense<0.000000e+00> : vector<32x128xf32>
    %24 = tpu.matmul %0, %23, %cst_22 {dimension_numbers = #tpu.dot_dimension_numbers<[1], [0], [0], [1], [0, 0, 1, 1], [], []>} : vector<32x32xf32>, vector<32x128xf32>, vector<32x128xf32> -> vector<32x128xf32>
    %c2 = arith.constant 2 : index
    %c0_23 = arith.constant 0 : index
    %c0_24 = arith.constant 0 : index
    %25 = vector.load %arg5[%c2, %c0_23, %c0_24] : memref<3x1x128xf32, #tpu.memory_space<vmem>>, vector<1x1x128xf32>
    %26 = vector.shape_cast %25 : vector<1x1x128xf32> to vector<1x128xf32>
    %27 = vector.broadcast %26 : vector<1x128xf32> to vector<32x128xf32>
    %28 = arith.addf %24, %27 : vector<32x128xf32>
    %29 = vector.shape_cast %28 : vector<32x128xf32> to vector<4x8x128xf32>
    %cst_25 = arith.constant dense<0x7F800000> : vector<4x128xf32>
    %30 = vector.multi_reduction <minimumf>, %29, %cst_25 [1] : vector<4x8x128xf32> to vector<4x128xf32>
    %c0_26 = arith.constant 0 : index
    %c0_27 = arith.constant 0 : index
    %31 = vector.load %arg6[%c0_26, %c0_27] : memref<4x128xf32, #tpu.memory_space<vmem>>, vector<4x128xf32>
    tpu.vector_store %arg6[%c0_26, %c0_27], %30 {strides = array<i32>} : memref<4x128xf32, #tpu.memory_space<vmem>>, vector<4x128xf32>,
    return
  }
  func.func @transform_0(%arg0: i32) -> (i32, i32) {
    %c0_i32 = arith.constant 0 : i32
    %c0_i32_0 = arith.constant 0 : i32
    %c0_i32_1 = arith.constant 0 : i32
    return %c0_i32, %c0_i32_0 : i32, i32
  }
  func.func @transform_1(%arg0: i32) -> (i32, i32) {
    %c0_i32 = arith.constant 0 : i32
    %c0_i32_0 = arith.constant 0 : i32
    %c0_i32_1 = arith.constant 0 : i32
    return %c0_i32, %c0_i32_0 : i32, i32
  }
  func.func @transform_2(%arg0: i32) -> (i32, i32) {
    %c0_i32 = arith.constant 0 : i32
    %c0_i32_0 = arith.constant 0 : i32
    %c0_i32_1 = arith.constant 0 : i32
    return %c0_i32, %c0_i32_0 : i32, i32
  }
  func.func @transform_3(%arg0: i32) -> (i32, i32, i32) {
    %c0_i32 = arith.constant 0 : i32
    %c0_i32_0 = arith.constant 0 : i32
    %c0_i32_1 = arith.constant 0 : i32
    %c0_i32_2 = arith.constant 0 : i32
    return %c0_i32, %c0_i32_0, %c0_i32_1 : i32, i32, i32
  }
  func.func @transform_4(%arg0: i32) -> (i32, i32, i32) {
    %c0_i32 = arith.constant 0 : i32
    %c0_i32_0 = arith.constant 0 : i32
    %c0_i32_1 = arith.constant 0 : i32
    %c0_i32_2 = arith.constant 0 : i32
    return %c0_i32, %c0_i32_0, %c0_i32_1 : i32, i32, i32
  }
  func.func @transform_5(%arg0: i32) -> (i32, i32) {
    %c0_i32 = arith.constant 0 : i32
    %c0_i32_0 = arith.constant 0 : i32
    %c0_i32_1 = arith.constant 0 : i32
    return %c0_i32, %c0_i32_0 : i32, i32
  }
}

</mosaic_0001>

<llo_original>
// kernel: gcn_mol_gcn_pallas.1
$region0: #{gcn_mol_gcn_pallas.1}
  #allocation0 [shape = 'u32[]', space=smem, size = 0x4, offset = 0x4, fixed_abs, tag = 'smem constant byte address 0x4 - core index']
  #allocation1 [shape = 'u32[144,128]{1,0:T(1,128)}', space=vmem, size = 0x12000, scoped, tag = 'internal scratch']
  %s0 = inlined_call_operand.vmem [shape: f32[32,32], index: 0, kind: input, shape index: {}]
  %s1 = inlined_call_operand.vmem [shape: f32[32,16], index: 1, kind: input, shape index: {}]
  %s2 = inlined_call_operand.vmem [shape: f32[16,128], index: 2, kind: input, shape index: {}]
  %s3 = inlined_call_operand.vmem [shape: f32[2,128,128], index: 3, kind: input, shape index: {}]
  %s4 = inlined_call_operand.vmem [shape: f32[3,1,128], index: 4, kind: input, shape index: {}]
  %s5 = inlined_call_operand.hbm [shape: f32[4,128], index: 5, kind: output, shape index: {}]
  %s6 = sld [smem:[#allocation0]]
  $region30: #{gcn_mol_gcn_pallas.1} parent=0
    _
  %s8 = ssub.s32 1, %s6
  %s9 = scalar_select 0, %s8, %s6
  $region1: #{gcn_mol_gcn_pallas.1} parent=0
    #allocation2 [shape = 'u8[2048]{0}', space=vmem, size = 0x800, scoped, tag = 'output window, operand 0, single buffered']
    #allocation3 [shape = 's32[1]{0}', space=sflag, size = 0x4, scoped, tag = 'scoped memory for gcn_mol_gcn_pallas.1']
    %10 = vsyncpa [#allocation3], 0
    // Predicated region
    $region2: #{gcn_mol_gcn_pallas.1} parent=1 // pred_check
      _
    $region3: #{gcn_mol_gcn_pallas.1} parent=1 // pred_check_branch
      %12 = sbr.rel (0) target = $region5
    $region4: #{gcn_mol_gcn_pallas.1} parent=1 // pred_region
      _
    $region5: #{gcn_mol_gcn_pallas.1} parent=1 // pred_fallthru
      _
    // Predicated region
    $region6: #{gcn_mol_gcn_pallas.1} parent=1 // pred_check
      _
    $region7: #{gcn_mol_gcn_pallas.1} parent=1 // pred_check_branch
      %14 = sbr.rel (0) target = $region9
    $region8: #{gcn_mol_gcn_pallas.1} parent=1 // pred_region
      _
    $region9: #{gcn_mol_gcn_pallas.1} parent=1 // pred_fallthru
      _
    // Predicated region
    $region10: #{gcn_mol_gcn_pallas.1} parent=1 // pred_check
      _
    $region11: #{gcn_mol_gcn_pallas.1} parent=1 // pred_check_branch
      %16 = sbr.rel (0) target = $region13
    $region12: #{gcn_mol_gcn_pallas.1} parent=1 // pred_region
      _
    $region13: #{gcn_mol_gcn_pallas.1} parent=1 // pred_fallthru
      _
    // Predicated region
    $region14: #{gcn_mol_gcn_pallas.1} parent=1 // pred_check
      _
    $region15: #{gcn_mol_gcn_pallas.1} parent=1 // pred_check_branch
      %18 = sbr.rel (0) target = $region17
    $region16: #{gcn_mol_gcn_pallas.1} parent=1 // pred_region
      _
    $region17: #{gcn_mol_gcn_pallas.1} parent=1 // pred_fallthru
      _
    // Predicated region
    $region18: #{gcn_mol_gcn_pallas.1} parent=1 // pred_check
      _
    $region19: #{gcn_mol_gcn_pallas.1} parent=1 // pred_check_branch
      %20 = sbr.rel (0) target = $region21
    $region20: #{gcn_mol_gcn_pallas.1} parent=1 // pred_region
      _
    $region21: #{gcn_mol_gcn_pallas.1} parent=1 // pred_fallthru
      _
    %v21 = vld [vmem:[%s0] sm:$0xff]
    %v22 = vld [vmem:[%s0 + $0x8] sm:$0xff]
    %v23 = vld [vmem:[%s0 + $0x10] sm:$0xff]
    %v24 = vld [vmem:[%s0 + $0x18] sm:$0xff]
    %v25 = vld [vmem:[%s1] sm:$0xff]
    %v26 = vld [vmem:[%s1 + $0x8] sm:$0xff]
    %v27 = vld [vmem:[%s1 + $0x10] sm:$0xff]
    %v28 = vld [vmem:[%s1 + $0x18] sm:$0xff]
    %v29 = vld [vmem:[%s2] sm:$0xff]
    %v30 = vld [vmem:[%s2 + $0x8] sm:$0xff]
    %vm31 = vcmask 130048
    %v33 = vsel %vm31, %v25, 0
    %v36 = vsel %vm31, %v26, 0
    %v39 = vsel %vm31, %v27, 0
    %v42 = vsel %vm31, %v28, 0
    %44 = vmatprep.subr.mxu0 0.0
    %45 = vmatpush1.msra.mxu0 %v29
    %46 = vmatprep.subr.mxu0 0.0
    %47 = vmatpush1.msra.mxu0 %v30
    %48 = vmatprep.subr.mxu0 0.0
    %49 = vmatpush1.msra.mxu0 0.0
    %50 = vmatprep.subr.mxu0 0.0
    %51 = vmatpush1.msra.mxu0 0.0
    %52 = vmatprep.subr.mxu0 0.0
    %53 = vmatpush1.msra.mxu0 0.0
    %54 = vmatprep.subr.mxu0 0.0
    %55 = vmatpush1.msra.mxu0 0.0
    %56 = vmatprep.subr.mxu0 0.0
    %57 = vmatpush1.msra.mxu0 0.0
    %58 = vmatprep.subr.mxu0 0.0
    %59 = vmatpush1.msra.mxu0 0.0
    %60 = vmatprep.subr.mxu0 0.0
    %61 = vmatpush1.msra.mxu0 0.0
    %62 = vmatprep.subr.mxu0 0.0
    %63 = vmatpush1.msra.mxu0 0.0
    %64 = vmatprep.subr.mxu0 0.0
    %65 = vmatpush1.msra.mxu0 0.0
    %66 = vmatprep.subr.mxu0 0.0
    %67 = vmatpush1.msra.mxu0 0.0
    %68 = vmatprep.subr.mxu0 0.0
    %69 = vmatpush1.msra.mxu0 0.0
    %70 = vmatprep.subr.mxu0 0.0
    %71 = vmatpush1.msra.mxu0 0.0
    %72 = vmatprep.subr.mxu0 0.0
    %73 = vmatpush1.msra.mxu0 0.0
    %74 = vmatprep.subr.mxu0 0.0
    %75 = vmatpush1.msra.mxu0 0.0
    %76 = vmatprep.subr.mxu0 0.0
    %77 = vmatpush1.msra.mxu0 0.0
    %78 = vmatprep.subr.mxu0 0.0
    %79 = vmatpush1.msra.mxu0 0.0
    %80 = vmatprep.subr.mxu0 0.0
    %81 = vmatpush1.msra.mxu0 0.0
    %82 = vmatprep.subr.mxu0 0.0
    %83 = vmatpush1.msra.mxu0 0.0
    %84 = vmatprep.subr.mxu0 0.0
    %85 = vmatpush1.msra.mxu0 0.0
    %86 = vmatprep.subr.mxu0 0.0
    %87 = vmatpush1.msra.mxu0 0.0
    %88 = vmatprep.subr.mxu0 0.0
    %89 = vmatpush1.msra.mxu0 0.0
    %90 = vmatprep.subr.mxu0 0.0
    %91 = vmatpush1.msra.mxu0 0.0
    %92 = vmatprep.subr.mxu0 0.0
    %93 = vmatpush1.msra.mxu0 0.0
    %94 = vmatprep.subr.mxu0 0.0
    %95 = vmatpush1.msra.mxu0 0.0
    %96 = vmatprep.subr.mxu0 0.0
    %97 = vmatpush1.msra.mxu0 0.0
    %98 = vmatprep.subr.mxu0 0.0
    %99 = vmatpush1.msra.mxu0 0.0
    %100 = vmatprep.subr.mxu0 0.0
    %101 = vmatpush1.msra.mxu0 0.0
    %102 = vmatprep.subr.mxu0 0.0
    %103 = vmatpush1.msra.mxu0 0.0
    %104 = vmatprep.subr.mxu0 0.0
    %105 = vmatpush1.msra.mxu0 0.0
    %106 = vmatprep.subr.mxu0 0.0
    %107 = vmatpush1.msra.mxu0 0.0
    %108 = vmatprep.mubr.f32.mxu0 0.0
    %109 = vmatmul.mubr.f32.gmra.mrb[0].mxu0 %v33
    %v110 = vpop.f32.mrb[0].mxu0
    %v111 = vadd.f32 0.0, %v110
    %v112 = vpop.f32.mrb[0].mxu0
    %113 = vmatprep.mubr.f32.mxu0 0.0
    %114 = vmatmul.mubr.f32.gmra.mrb[0].mxu0 %v36
    %v115 = vpop.f32.mrb[0].mxu0
    %v116 = vadd.f32 0.0, %v115
    %v117 = vpop.f32.mrb[0].mxu0
    %118 = vmatprep.mubr.f32.mxu0 0.0
    %119 = vmatmul.mubr.f32.gmra.mrb[0].mxu0 %v39
    %v120 = vpop.f32.mrb[0].mxu0
    %v121 = vadd.f32 0.0, %v120
    %v122 = vpop.f32.mrb[0].mxu0
    %123 = vmatprep.mubr.f32.mxu0 0.0
    %124 = vmatmul.mubr.f32.gmra.mrb[0].mxu0 %v42
    %v125 = vpop.f32.mrb[0].mxu0
    %v126 = vadd.f32 0.0, %v125
    %v127 = vpop.f32.mrb[0].mxu0
    %128 = vdwg.mxu0
    %v129 = vld [vmem:[%s4] sm:$0x1]
    %v131 = vlaneseq
    %v132 = vshrl.u32 %v131, 7
    %v133 = vsub.s32 0, %v132
    %v134 = vrot.slane %v129, %v133
    %vm136 = vcmask 261120
    %v138 = vsel %vm136, %v21, 0
    %v141 = vsel %vm136, %v22, 0
    %v144 = vsel %vm136, %v23, 0
    %v147 = vsel %vm136, %v24, 0
    %149 = vmatprep.subr.mxu0 0.0
    %150 = vmatpush1.msra.mxu0 %v111
    %151 = vmatprep.subr.mxu0 0.0
    %152 = vmatpush1.msra.mxu0 %v116
    %153 = vmatprep.subr.mxu0 0.0
    %154 = vmatpush1.msra.mxu0 %v121
    %155 = vmatprep.subr.mxu0 0.0
    %156 = vmatpush1.msra.mxu0 %v126
    %157 = vmatprep.subr.mxu0 0.0
    %158 = vmatpush1.msra.mxu0 0.0
    %159 = vmatprep.subr.mxu0 0.0
    %160 = vmatpush1.msra.mxu0 0.0
    %161 = vmatprep.subr.mxu0 0.0
    %162 = vmatpush1.msra.mxu0 0.0
    %163 = vmatprep.subr.mxu0 0.0
    %164 = vmatpush1.msra.mxu0 0.0
    %165 = vmatprep.subr.mxu0 0.0
    %166 = vmatpush1.msra.mxu0 0.0
    %167 = vmatprep.subr.mxu0 0.0
    %168 = vmatpush1.msra.mxu0 0.0
    %169 = vmatprep.subr.mxu0 0.0
    %170 = vmatpush1.msra.mxu0 0.0
    %171 = vmatprep.subr.mxu0 0.0
    %172 = vmatpush1.msra.mxu0 0.0
    %173 = vmatprep.subr.mxu0 0.0
    %174 = vmatpush1.msra.mxu0 0.0
    %175 = vmatprep.subr.mxu0 0.0
    %176 = vmatpush1.msra.mxu0 0.0
    %177 = vmatprep.subr.mxu0 0.0
    %178 = vmatpush1.msra.mxu0 0.0
    %179 = vmatprep.subr.mxu0 0.0
    %180 = vmatpush1.msra.mxu0 0.0
    %181 = vmatprep.subr.mxu0 0.0
    %182 = vmatpush1.msra.mxu0 0.0
    %183 = vmatprep.subr.mxu0 0.0
    %184 = vmatpush1.msra.mxu0 0.0
    %185 = vmatprep.subr.mxu0 0.0
    %186 = vmatpush1.msra.mxu0 0.0
    %187 = vmatprep.subr.mxu0 0.0
    %188 = vmatpush1.msra.mxu0 0.0
    %189 = vmatprep.subr.mxu0 0.0
    %190 = vmatpush1.msra.mxu0 0.0
    %191 = vmatprep.subr.mxu0 0.0
    %192 = vmatpush1.msra.mxu0 0.0
    %193 = vmatprep.subr.mxu0 0.0
    %194 = vmatpush1.msra.mxu0 0.0
    %195 = vmatprep.subr.mxu0 0.0
    %196 = vmatpush1.msra.mxu0 0.0
    %197 = vmatprep.subr.mxu0 0.0
    %198 = vmatpush1.msra.mxu0 0.0
    %199 = vmatprep.subr.mxu0 0.0
    %200 = vmatpush1.msra.mxu0 0.0
    %201 = vmatprep.subr.mxu0 0.0
    %202 = vmatpush1.msra.mxu0 0.0
    %203 = vmatprep.subr.mxu0 0.0
    %204 = vmatpush1.msra.mxu0 0.0
    %205 = vmatprep.subr.mxu0 0.0
    %206 = vmatpush1.msra.mxu0 0.0
    %207 = vmatprep.subr.mxu0 0.0
    %208 = vmatpush1.msra.mxu0 0.0
    %209 = vmatprep.subr.mxu0 0.0
    %210 = vmatpush1.msra.mxu0 0.0
    %211 = vmatprep.subr.mxu0 0.0
    %212 = vmatpush1.msra.mxu0 0.0
    %213 = vmatprep.mubr.f32.mxu0 0.0
    %214 = vmatmul.mubr.f32.gmra.mrb[0].mxu0 %v138
    %v215 = vpop.f32.mrb[0].mxu0
    %v216 = vadd.f32 %v134, %v215
    %v217 = vpop.f32.mrb[0].mxu0
    %218 = vmatprep.mubr.f32.mxu0 0.0
    %219 = vmatmul.mubr.f32.gmra.mrb[0].mxu0 %v141
    %v220 = vpop.f32.mrb[0].mxu0
    %v221 = vadd.f32 %v134, %v220
    %v222 = vpop.f32.mrb[0].mxu0
    %223 = vmatprep.mubr.f32.mxu0 0.0
    %224 = vmatmul.mubr.f32.gmra.mrb[0].mxu0 %v144
    %v225 = vpop.f32.mrb[0].mxu0
    %v226 = vadd.f32 %v134, %v225
    %v227 = vpop.f32.mrb[0].mxu0
    %228 = vmatprep.mubr.f32.mxu0 0.0
    %229 = vmatmul.mubr.f32.gmra.mrb[0].mxu0 %v147
    %v230 = vpop.f32.mrb[0].mxu0
    %v231 = vadd.f32 %v134, %v230
    %v232 = vpop.f32.mrb[0].mxu0
    %233 = vdwg.mxu0
    %v234 = vmax.f32 %v216, 0.0
    %v235 = vmax.f32 %v221, 0.0
    %v236 = vmax.f32 %v226, 0.0
    %v237 = vmax.f32 %v231, 0.0
    %v238 = vld [vmem:[%s3] sm:$0xff]
    %v239 = vld [vmem:[%s3 + $0x8] sm:$0xff]
    %v240 = vld [vmem:[%s3 + $0x10] sm:$0xff]
    %v241 = vld [vmem:[%s3 + $0x18] sm:$0xff]
    %v242 = vld [vmem:[%s3 + $0x20] sm:$0xff]
    %v243 = vld [vmem:[%s3 + $0x28] sm:$0xff]
    %v244 = vld [vmem:[%s3 + $0x30] sm:$0xff]
    %v245 = vld [vmem:[%s3 + $0x38] sm:$0xff]
    %v246 = vld [vmem:[%s3 + $0x40] sm:$0xff]
    %v247 = vld [vmem:[%s3 + $0x48] sm:$0xff]
    %v248 = vld [vmem:[%s3 + $0x50] sm:$0xff]
    %v249 = vld [vmem:[%s3 + $0x58] sm:$0xff]
    %v250 = vld [vmem:[%s3 + $0x60] sm:$0xff]
    %v251 = vld [vmem:[%s3 + $0x68] sm:$0xff]
    %v252 = vld [vmem:[%s3 + $0x70] sm:$0xff]
    %v253 = vld [vmem:[%s3 + $0x78] sm:$0xff]
    %254 = vmatprep.subr.mxu0 0.0
    %255 = vmatpush1.msra.mxu0 %v238
    %256 = vmatprep.subr.mxu0 0.0
    %257 = vmatpush1.msra.mxu0 %v239
    %258 = vmatprep.subr.mxu0 0.0
    %259 = vmatpush1.msra.mxu0 %v240
    %260 = vmatprep.subr.mxu0 0.0
    %261 = vmatpush1.msra.mxu0 %v241
    %262 = vmatprep.subr.mxu0 0.0
    %263 = vmatpush1.msra.mxu0 %v242
    %264 = vmatprep.subr.mxu0 0.0
    %265 = vmatpush1.msra.mxu0 %v243
    %266 = vmatprep.subr.mxu0 0.0
    %267 = vmatpush1.msra.mxu0 %v244
    %268 = vmatprep.subr.mxu0 0.0
    %269 = vmatpush1.msra.mxu0 %v245
    %270 = vmatprep.subr.mxu0 0.0
    %271 = vmatpush1.msra.mxu0 %v246
    %272 = vmatprep.subr.mxu0 0.0
    %273 = vmatpush1.msra.mxu0 %v247
    %274 = vmatprep.subr.mxu0 0.0
    %275 = vmatpush1.msra.mxu0 %v248
    %276 = vmatprep.subr.mxu0 0.0
    %277 = vmatpush1.msra.mxu0 %v249
    %278 = vmatprep.subr.mxu0 0.0
    %279 = vmatpush1.msra.mxu0 %v250
    %280 = vmatprep.subr.mxu0 0.0
    %281 = vmatpush1.msra.mxu0 %v251
    %282 = vmatprep.subr.mxu0 0.0
    %283 = vmatpush1.msra.mxu0 %v252
    %284 = vmatprep.subr.mxu0 0.0
    %285 = vmatpush1.msra.mxu0 %v253
    %286 = vmatprep.subr.mxu0 0.0
    %287 = vmatpush1.msra.mxu0 0.0
    %288 = vmatprep.subr.mxu0 0.0
    %289 = vmatpush1.msra.mxu0 0.0
    %290 = vmatprep.subr.mxu0 0.0
    %291 = vmatpush1.msra.mxu0 0.0
    %292 = vmatprep.subr.mxu0 0.0
    %293 = vmatpush1.msra.mxu0 0.0
    %294 = vmatprep.subr.mxu0 0.0
    %295 = vmatpush1.msra.mxu0 0.0
    %296 = vmatprep.subr.mxu0 0.0
    %297 = vmatpush1.msra.mxu0 0.0
    %298 = vmatprep.subr.mxu0 0.0
    %299 = vmatpush1.msra.mxu0 0.0
    %300 = vmatprep.subr.mxu0 0.0
    %301 = vmatpush1.msra.mxu0 0.0
    %302 = vmatprep.subr.mxu0 0.0
    %303 = vmatpush1.msra.mxu0 0.0
    %304 = vmatprep.subr.mxu0 0.0
    %305 = vmatpush1.msra.mxu0 0.0
    %306 = vmatprep.subr.mxu0 0.0
    %307 = vmatpush1.msra.mxu0 0.0
    %308 = vmatprep.subr.mxu0 0.0
    %309 = vmatpush1.msra.mxu0 0.0
    %310 = vmatprep.subr.mxu0 0.0
    %311 = vmatpush1.msra.mxu0 0.0
    %312 = vmatprep.subr.mxu0 0.0
    %313 = vmatpush1.msra.mxu0 0.0
    %314 = vmatprep.subr.mxu0 0.0
    %315 = vmatpush1.msra.mxu0 0.0
    %316 = vmatprep.subr.mxu0 0.0
    %317 = vmatpush1.msra.mxu0 0.0
    %318 = vmatprep.mubr.f32.mxu0 0.0
    %319 = vmatmul.mubr.f32.gmra.mrb[0].mxu0 %v234
    %v320 = vpop.f32.mrb[0].mxu0
    %v321 = vadd.f32 0.0, %v320
    %v322 = vpop.f32.mrb[0].mxu0
    %323 = vmatprep.mubr.f32.mxu0 0.0
    %324 = vmatmul.mubr.f32.gmra.mrb[0].mxu0 %v235
    %v325 = vpop.f32.mrb[0].mxu0
    %v326 = vadd.f32 0.0, %v325
    %v327 = vpop.f32.mrb[0].mxu0
    %328 = vmatprep.mubr.f32.mxu0 0.0
    %329 = vmatmul.mubr.f32.gmra.mrb[0].mxu0 %v236
    %v330 = vpop.f32.mrb[0].mxu0
    %v331 = vadd.f32 0.0, %v330
    %v332 = vpop.f32.mrb[0].mxu0
    %333 = vmatprep.mubr.f32.mxu0 0.0
    %334 = vmatmul.mubr.f32.gmra.mrb[0].mxu0 %v237
    %v335 = vpop.f32.mrb[0].mxu0
    %v336 = vadd.f32 0.0, %v335
    %v337 = vpop.f32.mrb[0].mxu0
    %338 = vdwg.mxu0
    %s339 = scalar_lea.vmem %s4, 1
    %v340 = vld [vmem:[%s339] sm:$0x1]
    %v342 = vlaneseq
    %v343 = vshrl.u32 %v342, 7
    %v344 = vsub.s32 0, %v343
    %v345 = vrot.slane %v340, %v344
    %347 = vmatprep.subr.mxu0 0.0
    %348 = vmatpush1.msra.mxu0 %v321
    %349 = vmatprep.subr.mxu0 0.0
    %350 = vmatpush1.msra.mxu0 %v326
    %351 = vmatprep.subr.mxu0 0.0
    %352 = vmatpush1.msra.mxu0 %v331
    %353 = vmatprep.subr.mxu0 0.0
    %354 = vmatpush1.msra.mxu0 %v336
    %355 = vmatprep.subr.mxu0 0.0
    %356 = vmatpush1.msra.mxu0 0.0
    %357 = vmatprep.subr.mxu0 0.0
    %358 = vmatpush1.msra.mxu0 0.0
    %359 = vmatprep.subr.mxu0 0.0
    %360 = vmatpush1.msra.mxu0 0.0
    %361 = vmatprep.subr.mxu0 0.0
    %362 = vmatpush1.msra.mxu0 0.0
    %363 = vmatprep.subr.mxu0 0.0
    %364 = vmatpush1.msra.mxu0 0.0
    %365 = vmatprep.subr.mxu0 0.0
    %366 = vmatpush1.msra.mxu0 0.0
    %367 = vmatprep.subr.mxu0 0.0
    %368 = vmatpush1.msra.mxu0 0.0
    %369 = vmatprep.subr.mxu0 0.0
    %370 = vmatpush1.msra.mxu0 0.0
    %371 = vmatprep.subr.mxu0 0.0
    %372 = vmatpush1.msra.mxu0 0.0
    %373 = vmatprep.subr.mxu0 0.0
    %374 = vmatpush1.msra.mxu0 0.0
    %375 = vmatprep.subr.mxu0 0.0
    %376 = vmatpush1.msra.mxu0 0.0
    %377 = vmatprep.subr.mxu0 0.0
    %378 = vmatpush1.msra.mxu0 0.0
    %379 = vmatprep.subr.mxu0 0.0
    %380 = vmatpush1.msra.mxu0 0.0
    %381 = vmatprep.subr.mxu0 0.0
    %382 = vmatpush1.msra.mxu0 0.0
    %383 = vmatprep.subr.mxu0 0.0
    %384 = vmatpush1.msra.mxu0 0.0
    %385 = vmatprep.subr.mxu0 0.0
    %386 = vmatpush1.msra.mxu0 0.0
    %387 = vmatprep.subr.mxu0 0.0
    %388 = vmatpush1.msra.mxu0 0.0
    %389 = vmatprep.subr.mxu0 0.0
    %390 = vmatpush1.msra.mxu0 0.0
    %391 = vmatprep.subr.mxu0 0.0
    %392 = vmatpush1.msra.mxu0 0.0
    %393 = vmatprep.subr.mxu0 0.0
    %394 = vmatpush1.msra.mxu0 0.0
    %395 = vmatprep.subr.mxu0 0.0
    %396 = vmatpush1.msra.mxu0 0.0
    %397 = vmatprep.subr.mxu0 0.0
    %398 = vmatpush1.msra.mxu0 0.0
    %399 = vmatprep.subr.mxu0 0.0
    %400 = vmatpush1.msra.mxu0 0.0
    %401 = vmatprep.subr.mxu0 0.0
    %402 = vmatpush1.msra.mxu0 0.0
    %403 = vmatprep.subr.mxu0 0.0
    %404 = vmatpush1.msra.mxu0 0.0
    %405 = vmatprep.subr.mxu0 0.0
    %406 = vmatpush1.msra.mxu0 0.0
    %407 = vmatprep.subr.mxu0 0.0
    %408 = vmatpush1.msra.mxu0 0.0
    %409 = vmatprep.subr.mxu0 0.0
    %410 = vmatpush1.msra.mxu0 0.0
    %411 = vmatprep.mubr.f32.mxu0 0.0
    %412 = vmatmul.mubr.f32.gmra.mrb[0].mxu0 %v138
    %v413 = vpop.f32.mrb[0].mxu0
    %v414 = vadd.f32 %v345, %v413
    %v415 = vpop.f32.mrb[0].mxu0
    %416 = vmatprep.mubr.f32.mxu0 0.0
    %417 = vmatmul.mubr.f32.gmra.mrb[0].mxu0 %v141
    %v418 = vpop.f32.mrb[0].mxu0
    %v419 = vadd.f32 %v345, %v418
    %v420 = vpop.f32.mrb[0].mxu0
    %421 = vmatprep.mubr.f32.mxu0 0.0
    %422 = vmatmul.mubr.f32.gmra.mrb[0].mxu0 %v144
    %v423 = vpop.f32.mrb[0].mxu0
    %v424 = vadd.f32 %v345, %v423
    %v425 = vpop.f32.mrb[0].mxu0
    %426 = vmatprep.mubr.f32.mxu0 0.0
    %427 = vmatmul.mubr.f32.gmra.mrb[0].mxu0 %v147
    %v428 = vpop.f32.mrb[0].mxu0
    %v429 = vadd.f32 %v345, %v428
    %v430 = vpop.f32.mrb[0].mxu0
    %431 = vdwg.mxu0
    %v432 = vmax.f32 %v414, 0.0
    %v433 = vmax.f32 %v419, 0.0
    %v434 = vmax.f32 %v424, 0.0
    %v435 = vmax.f32 %v429, 0.0
    %s436 = scalar_lea.vmem %s3, 128
    %v437 = vld [vmem:[%s436] sm:$0xff]
    %v438 = vld [vmem:[%s436 + $0x8] sm:$0xff]
    %v439 = vld [vmem:[%s436 + $0x10] sm:$0xff]
    %v440 = vld [vmem:[%s436 + $0x18] sm:$0xff]
    %v441 = vld [vmem:[%s436 + $0x20] sm:$0xff]
    %v442 = vld [vmem:[%s436 + $0x28] sm:$0xff]
    %v443 = vld [vmem:[%s436 + $0x30] sm:$0xff]
    %v444 = vld [vmem:[%s436 + $0x38] sm:$0xff]
    %v445 = vld [vmem:[%s436 + $0x40] sm:$0xff]
    %v446 = vld [vmem:[%s436 + $0x48] sm:$0xff]
    %v447 = vld [vmem:[%s436 + $0x50] sm:$0xff]
    %v448 = vld [vmem:[%s436 + $0x58] sm:$0xff]
    %v449 = vld [vmem:[%s436 + $0x60] sm:$0xff]
    %v450 = vld [vmem:[%s436 + $0x68] sm:$0xff]
    %v451 = vld [vmem:[%s436 + $0x70] sm:$0xff]
    %v452 = vld [vmem:[%s436 + $0x78] sm:$0xff]
    %453 = vmatprep.subr.mxu0 0.0
    %454 = vmatpush1.msra.mxu0 %v437
    %455 = vmatprep.subr.mxu0 0.0
    %456 = vmatpush1.msra.mxu0 %v438
    %457 = vmatprep.subr.mxu0 0.0
    %458 = vmatpush1.msra.mxu0 %v439
    %459 = vmatprep.subr.mxu0 0.0
    %460 = vmatpush1.msra.mxu0 %v440
    %461 = vmatprep.subr.mxu0 0.0
    %462 = vmatpush1.msra.mxu0 %v441
    %463 = vmatprep.subr.mxu0 0.0
    %464 = vmatpush1.msra.mxu0 %v442
    %465 = vmatprep.subr.mxu0 0.0
    %466 = vmatpush1.msra.mxu0 %v443
    %467 = vmatprep.subr.mxu0 0.0
    %468 = vmatpush1.msra.mxu0 %v444
    %469 = vmatprep.subr.mxu0 0.0
    %470 = vmatpush1.msra.mxu0 %v445
    %471 = vmatprep.subr.mxu0 0.0
    %472 = vmatpush1.msra.mxu0 %v446
    %473 = vmatprep.subr.mxu0 0.0
    %474 = vmatpush1.msra.mxu0 %v447
    %475 = vmatprep.subr.mxu0 0.0
    %476 = vmatpush1.msra.mxu0 %v448
    %477 = vmatprep.subr.mxu0 0.0
    %478 = vmatpush1.msra.mxu0 %v449
    %479 = vmatprep.subr.mxu0 0.0
    %480 = vmatpush1.msra.mxu0 %v450
    %481 = vmatprep.subr.mxu0 0.0
    %482 = vmatpush1.msra.mxu0 %v451
    %483 = vmatprep.subr.mxu0 0.0
    %484 = vmatpush1.msra.mxu0 %v452
    %485 = vmatprep.subr.mxu0 0.0
    %486 = vmatpush1.msra.mxu0 0.0
    %487 = vmatprep.subr.mxu0 0.0
    %488 = vmatpush1.msra.mxu0 0.0
    %489 = vmatprep.subr.mxu0 0.0
    %490 = vmatpush1.msra.mxu0 0.0
    %491 = vmatprep.subr.mxu0 0.0
    %492 = vmatpush1.msra.mxu0 0.0
    %493 = vmatprep.subr.mxu0 0.0
    %494 = vmatpush1.msra.mxu0 0.0
    %495 = vmatprep.subr.mxu0 0.0
    %496 = vmatpush1.msra.mxu0 0.0
    %497 = vmatprep.subr.mxu0 0.0
    %498 = vmatpush1.msra.mxu0 0.0
    %499 = vmatprep.subr.mxu0 0.0
    %500 = vmatpush1.msra.mxu0 0.0
    %501 = vmatprep.subr.mxu0 0.0
    %502 = vmatpush1.msra.mxu0 0.0
    %503 = vmatprep.subr.mxu0 0.0
    %504 = vmatpush1.msra.mxu0 0.0
    %505 = vmatprep.subr.mxu0 0.0
    %506 = vmatpush1.msra.mxu0 0.0
    %507 = vmatprep.subr.mxu0 0.0
    %508 = vmatpush1.msra.mxu0 0.0
    %509 = vmatprep.subr.mxu0 0.0
    %510 = vmatpush1.msra.mxu0 0.0
    %511 = vmatprep.subr.mxu0 0.0
    %512 = vmatpush1.msra.mxu0 0.0
    %513 = vmatprep.subr.mxu0 0.0
    %514 = vmatpush1.msra.mxu0 0.0
    %515 = vmatprep.subr.mxu0 0.0
    %516 = vmatpush1.msra.mxu0 0.0
    %517 = vmatprep.mubr.f32.mxu0 0.0
    %518 = vmatmul.mubr.f32.gmra.mrb[0].mxu0 %v432
    %v519 = vpop.f32.mrb[0].mxu0
    %v520 = vadd.f32 0.0, %v519
    %v521 = vpop.f32.mrb[0].mxu0
    %522 = vmatprep.mubr.f32.mxu0 0.0
    %523 = vmatmul.mubr.f32.gmra.mrb[0].mxu0 %v433
    %v524 = vpop.f32.mrb[0].mxu0
    %v525 = vadd.f32 0.0, %v524
    %v526 = vpop.f32.mrb[0].mxu0
    %527 = vmatprep.mubr.f32.mxu0 0.0
    %528 = vmatmul.mubr.f32.gmra.mrb[0].mxu0 %v434
    %v529 = vpop.f32.mrb[0].mxu0
    %v530 = vadd.f32 0.0, %v529
    %v531 = vpop.f32.mrb[0].mxu0
    %532 = vmatprep.mubr.f32.mxu0 0.0
    %533 = vmatmul.mubr.f32.gmra.mrb[0].mxu0 %v435
    %v534 = vpop.f32.mrb[0].mxu0
    %v535 = vadd.f32 0.0, %v534
    %v536 = vpop.f32.mrb[0].mxu0
    %537 = vdwg.mxu0
    %s538 = scalar_lea.vmem %s4, 2
    %v539 = vld [vmem:[%s538] sm:$0x1]
    %v541 = vlaneseq
    %v542 = vshrl.u32 %v541, 7
    %v543 = vsub.s32 0, %v542
    %v544 = vrot.slane %v539, %v543
    %546 = vmatprep.subr.mxu0 0.0
    %547 = vmatpush1.msra.mxu0 %v520
    %548 = vmatprep.subr.mxu0 0.0
    %549 = vmatpush1.msra.mxu0 %v525
    %550 = vmatprep.subr.mxu0 0.0
    %551 = vmatpush1.msra.mxu0 %v530
    %552 = vmatprep.subr.mxu0 0.0
    %553 = vmatpush1.msra.mxu0 %v535
    %554 = vmatprep.subr.mxu0 0.0
    %555 = vmatpush1.msra.mxu0 0.0
    %556 = vmatprep.subr.mxu0 0.0
    %557 = vmatpush1.msra.mxu0 0.0
    %558 = vmatprep.subr.mxu0 0.0
    %559 = vmatpush1.msra.mxu0 0.0
    %560 = vmatprep.subr.mxu0 0.0
    %561 = vmatpush1.msra.mxu0 0.0
    %562 = vmatprep.subr.mxu0 0.0
    %563 = vmatpush1.msra.mxu0 0.0
    %564 = vmatprep.subr.mxu0 0.0
    %565 = vmatpush1.msra.mxu0 0.0
    %566 = vmatprep.subr.mxu0 0.0
    %567 = vmatpush1.msra.mxu0 0.0
    %568 = vmatprep.subr.mxu0 0.0
    %569 = vmatpush1.msra.mxu0 0.0
    %570 = vmatprep.subr.mxu0 0.0
    %571 = vmatpush1.msra.mxu0 0.0
    %572 = vmatprep.subr.mxu0 0.0
    %573 = vmatpush1.msra.mxu0 0.0
    %574 = vmatprep.subr.mxu0 0.0
    %575 = vmatpush1.msra.mxu0 0.0
    %576 = vmatprep.subr.mxu0 0.0
    %577 = vmatpush1.msra.mxu0 0.0
    %578 = vmatprep.subr.mxu0 0.0
    %579 = vmatpush1.msra.mxu0 0.0
    %580 = vmatprep.subr.mxu0 0.0
    %581 = vmatpush1.msra.mxu0 0.0
    %582 = vmatprep.subr.mxu0 0.0
    %583 = vmatpush1.msra.mxu0 0.0
    %584 = vmatprep.subr.mxu0 0.0
    %585 = vmatpush1.msra.mxu0 0.0
    %586 = vmatprep.subr.mxu0 0.0
    %587 = vmatpush1.msra.mxu0 0.0
    %588 = vmatprep.subr.mxu0 0.0
    %589 = vmatpush1.msra.mxu0 0.0
    %590 = vmatprep.subr.mxu0 0.0
    %591 = vmatpush1.msra.mxu0 0.0
    %592 = vmatprep.subr.mxu0 0.0
    %593 = vmatpush1.msra.mxu0 0.0
    %594 = vmatprep.subr.mxu0 0.0
    %595 = vmatpush1.msra.mxu0 0.0
    %596 = vmatprep.subr.mxu0 0.0
    %597 = vmatpush1.msra.mxu0 0.0
    %598 = vmatprep.subr.mxu0 0.0
    %599 = vmatpush1.msra.mxu0 0.0
    %600 = vmatprep.subr.mxu0 0.0
    %601 = vmatpush1.msra.mxu0 0.0
    %602 = vmatprep.subr.mxu0 0.0
    %603 = vmatpush1.msra.mxu0 0.0
    %604 = vmatprep.subr.mxu0 0.0
    %605 = vmatpush1.msra.mxu0 0.0
    %606 = vmatprep.subr.mxu0 0.0
    %607 = vmatpush1.msra.mxu0 0.0
    %608 = vmatprep.subr.mxu0 0.0
    %609 = vmatpush1.msra.mxu0 0.0
    %610 = vmatprep.mubr.f32.mxu0 0.0
    %611 = vmatmul.mubr.f32.gmra.mrb[0].mxu0 %v138
    %v612 = vpop.f32.mrb[0].mxu0
    %v613 = vadd.f32 %v544, %v612
    %v614 = vpop.f32.mrb[0].mxu0
    %615 = vmatprep.mubr.f32.mxu0 0.0
    %616 = vmatmul.mubr.f32.gmra.mrb[0].mxu0 %v141
    %v617 = vpop.f32.mrb[0].mxu0
    %v618 = vadd.f32 %v544, %v617
    %v619 = vpop.f32.mrb[0].mxu0
    %620 = vmatprep.mubr.f32.mxu0 0.0
    %621 = vmatmul.mubr.f32.gmra.mrb[0].mxu0 %v144
    %v622 = vpop.f32.mrb[0].mxu0
    %v623 = vadd.f32 %v544, %v622
    %v624 = vpop.f32.mrb[0].mxu0
    %625 = vmatprep.mubr.f32.mxu0 0.0
    %626 = vmatmul.mubr.f32.gmra.mrb[0].mxu0 %v147
    %v627 = vpop.f32.mrb[0].mxu0
    %v628 = vadd.f32 %v544, %v627
    %v629 = vpop.f32.mrb[0].mxu0
    %630 = vdwg.mxu0
    %v631 = vrot.slane %v613, 4
    %v632 = vmin.f32 %v613, %v631
    %v633 = vrot.slane %v632, 2
    %v634 = vmin.f32 %v632, %v633
    %v635 = vrot.slane %v634, 1
    %v636 = vmin.f32 %v634, %v635
    %v637 = vrot.slane %v618, 4
    %v638 = vmin.f32 %v618, %v637
    %v639 = vrot.slane %v638, 2
    %v640 = vmin.f32 %v638, %v639
    %v641 = vrot.slane %v640, 1
    %v642 = vmin.f32 %v640, %v641
    %v643 = vrot.slane %v623, 4
    %v644 = vmin.f32 %v623, %v643
    %v645 = vrot.slane %v644, 2
    %v646 = vmin.f32 %v644, %v645
    %v647 = vrot.slane %v646, 1
    %v648 = vmin.f32 %v646, %v647
    %v649 = vrot.slane %v628, 4
    %v650 = vmin.f32 %v628, %v649
    %v651 = vrot.slane %v650, 2
    %v652 = vmin.f32 %v650, %v651
    %v653 = vrot.slane %v652, 1
    %v654 = vmin.f32 %v652, %v653
    %vm659 = vcmask 1041409
    %v660 = vsel %vm659, %v642, %v636
    %vm661 = vcmask 1042434
    %v662 = vsel %vm661, %v648, %v660
    %vm663 = vcmask 1043459
    %v664 = vsel %vm663, %v654, %v662
    %666 = vst [vmem:[#allocation2] sm:$0xf] %v664
    // Predicated region
    $region22: #{gcn_mol_gcn_pallas.1} parent=1 // pred_check
      _
    $region23: #{gcn_mol_gcn_pallas.1} parent=1 // pred_check_branch
      %668 = sbr.rel (0) target = $region25
    $region24: #{gcn_mol_gcn_pallas.1} parent=1 // pred_region
      %s670 = ssub.s32 64, 64
      %671 = vsyncadd [#allocation3], %s670
      %s673 = sshll.u32 [#allocation2], 4
      %s674 = int_to_ptr.vmem [resolvable:$true] %s673
      %676 = dma.vmem_to_hbm [thread:$0]  %s674, 64, %s5, [#allocation3]
    $region25: #{gcn_mol_gcn_pallas.1} parent=1 // pred_fallthru
      _
    // Predicated region
    $region26: #{gcn_mol_gcn_pallas.1} parent=1 // pred_check
      _
    $region27: #{gcn_mol_gcn_pallas.1} parent=1 // pred_check_branch
      %678 = sbr.rel (0) target = $region29
    $region28: #{gcn_mol_gcn_pallas.1} parent=1 // pred_region
      %679 = dma.done [#allocation3], 64
    $region29: #{gcn_mol_gcn_pallas.1} parent=1 // pred_fallthru
      _
    %680 = vsyncpa [#allocation3], 1

</llo_original>
